<compile_context>
chip_gen: v7x
topology: tpu7x:2x2x1
jax: 0.10.0
libtpu: 0.0.40
codegen_flags: <defaults>
</compile_context>

<pallas_src>
import functools

import jax
import jax.numpy as jnp
from jax import lax
from jax.experimental import pallas as pl
from jax.experimental.pallas import tpu as pltpu

_LANES = 128
_PAD_TO = 2048              # time axis padded to a multiple of 16*128 (bf16 tiles)


def _round_up(n, m):
    return ((n + m - 1) // m) * m


def _vmem_limit_bytes(block_bytes):
    # Every blocked input/output is double-buffered by the BlockSpec pipeline.
    # Add headroom for compiler scratch; floor 4 MiB; cap at v7x physical 64 MiB.
    need = 2 * int(block_bytes) + (2 << 20)
    return int(min(max(need, 4 << 20), 64 << 20))


# --------------------------------------------------------------------------
# Kernel 1: add_rev  (normalized-RIR full convolution, truncated to L) -- MXU
# --------------------------------------------------------------------------
def build_rev_tap_matrices(rir):
    """(1,R) raw RIR -> two (128,128) f32 banded tap matrices for the MXU conv.

    With time index n = row*128 + lane:
      y[r,c] = sum_a x[r,a]   * T[a,c]       T[a,c]     = h[c-a]     , 0<=c-a<R
             + sum_a x[r-1,a] * Tprev[a,c]   Tprev[a,c] = h[c-a+128] , 0<=c-a+128<R
    which is exactly y[n] = sum_j h[j] * x[n-j].
    """
    R = rir.shape[1]
    assert 1 <= R <= _LANES
    taps = (rir[0] / jnp.sqrt(jnp.sum(rir * rir))).astype(jnp.float32)
    h = jnp.zeros((_LANES,), jnp.float32).at[:R].set(taps)
    a = jnp.arange(_LANES)
    d = a[None, :] - a[:, None]                 # d[a, c] = c - a
    t_mat = jnp.where((d >= 0) & (d < R), h[jnp.clip(d, 0, _LANES - 1)], 0.0)
    dp = d + _LANES
    tprev_mat = jnp.where((dp >= 0) & (dp < R),
                          h[jnp.clip(dp, 0, _LANES - 1)], 0.0)
    return t_mat.astype(jnp.float32), tprev_mat.astype(jnp.float32)


def _rev_conv_kernel(t_ref, tprev_ref, x_ref, o_ref):
    # t_ref, tprev_ref : (128,128) f32 banded tap matrices (shared across batch)
    # x_ref, o_ref     : (1, rows, 128) f32 per-batch audio slab
    x = x_ref[0]
    row = lax.broadcasted_iota(jnp.int32, x.shape, 0)
    # x_prev[r, :] = x[r-1, :]   (zeros for r == 0, i.e. time index < 0)
    x_prev = jnp.where(row == 0, 0.0, pltpu.roll(x, shift=1, axis=0))
    # Two (rows,128)x(128,128) MXU matmuls replace the per-tap roll/VPU loop.
    # f32 operands -> full-precision (multi-pass) MXU matmul, f32 accumulate.
    y = jnp.dot(x, t_ref[...], preferred_element_type=jnp.float32)
    y = y + jnp.dot(x_prev, tprev_ref[...], preferred_element_type=jnp.float32)
    o_ref[0] = y


def add_rev_pallas(x3d, t_mat, tprev_mat):
    """x3d: (B, rows, 128) f32 dense audio slabs -> (B, rows, 128) f32."""
    B, rows, lanes = x3d.shape
    assert lanes == _LANES
    block_bytes = 2 * _LANES * _LANES * 4 + 2 * rows * _LANES * 4
    return pl.pallas_call(
        _rev_conv_kernel,
        out_shape=jax.ShapeDtypeStruct((B, rows, _LANES), jnp.float32),
        grid=(B,),
        in_specs=[
            pl.BlockSpec((_LANES, _LANES), lambda b: (0, 0)),        # T
            pl.BlockSpec((_LANES, _LANES), lambda b: (0, 0)),        # T_prev
            pl.BlockSpec((1, rows, _LANES), lambda b: (b, 0, 0)),    # audio
        ],
        out_specs=pl.BlockSpec((1, rows, _LANES), lambda b: (b, 0, 0)),
        compiler_params=pltpu.CompilerParams(
            dimension_semantics=("parallel",),
            vmem_limit_bytes=_vmem_limit_bytes(block_bytes)),
    )(t_mat, tprev_mat, x3d)


# --------------------------------------------------------------------------
# Kernel 2: add_noise  (dB energies + SNR scaling + mix; 1 or 2 categories)
# --------------------------------------------------------------------------
def _add_noise_kernel(*refs, inv_len, num_groups):
    # refs = (pre_0..pre_{G-1}     : (Ng,) f32 SMEM   -- 10**(-snr/20),
    #         audio                : (1, rows, 128) f32,
    #         noises_0..noises_{G-1}: (Ng, rows, 128) bf16,
    #         out                  : (1, rows, 128) f32)
    pre_refs = refs[:num_groups]
    audio_ref = refs[num_groups]
    noise_refs = refs[num_groups + 1: 2 * num_groups + 1]
    o_ref = refs[2 * num_groups + 1]

    mixed = audio_ref[0]                                   # f32 accumulator
    for g in range(num_groups):                            # augtype==5: 2 groups
        # Clean energy of the CURRENT audio -- matches the original's
        # sequential add_noise(speech) -> add_noise(music) semantics.
        # (pad region of the slab is exactly zero, so /true_len is correct)
        clean_e = jnp.sum(mixed * mixed) * inv_len + 1e-4
        sqrt_clean = jnp.sqrt(clean_e)                     # hoisted out of loop
        pre_ref = pre_refs[g]
        bank = noise_refs[g]
        for n in range(bank.shape[0]):                     # small static N
            noise_n = bank[n].astype(jnp.float32)          # bf16 -> f32
            noise_e = jnp.sum(noise_n * noise_n) * inv_len + 1e-4
            # sqrt(10**((clean_db - noise_db - snr)/10))
            #   == sqrt(clean_e) * rsqrt(noise_e) * 10**(-snr/20)
            scale = sqrt_clean * lax.rsqrt(noise_e) * pre_ref[n]
            mixed = mixed + scale * noise_n                # fold directly in
    o_ref[0] = mixed


def add_noise_pallas(x3d, noise_banks, snr_pres, true_len):
    """x3d: (B, rows, 128) f32; noise_banks: list of (Ng, rows, 128) bf16
    (shared across the batch); snr_pres: list of (Ng,) f32 = 10**(-snr/20).
    Chained categories (augtype 5) run in ONE pallas_call."""
    B, rows, lanes = x3d.shape
    assert lanes == _LANES
    G = len(noise_banks)
    bank_bytes = sum(int(nb.size) * nb.dtype.itemsize for nb in noise_banks)
    block_bytes = 2 * rows * _LANES * 4 + bank_bytes
    in_specs = (
        [pl.BlockSpec(memory_space=pltpu.MemorySpace.SMEM)] * G       # pre factors
        + [pl.BlockSpec((1, rows, _LANES), lambda b: (b, 0, 0))]      # audio
        + [pl.BlockSpec(nb.shape, lambda b: (0, 0, 0))                # banks
           for nb in noise_banks]
    )
    return pl.pallas_call(
        functools.partial(_add_noise_kernel,
                          inv_len=1.0 / float(true_len), num_groups=G),
        out_shape=jax.ShapeDtypeStruct((B, rows, _LANES), jnp.float32),
        grid=(B,),
        in_specs=in_specs,
        out_specs=pl.BlockSpec((1, rows, _LANES), lambda b: (b, 0, 0)),
        # mixed audio overwrites the temporary audio slab in place
        input_output_aliases={G: 0},
        compiler_params=pltpu.CompilerParams(
            dimension_semantics=("parallel",),
            vmem_limit_bytes=_vmem_limit_bytes(block_bytes)),
    )(*snr_pres, x3d, *noise_banks)


# --------------------------------------------------------------------------
# Module wrapper (parameter setup = glue; hot paths = Pallas kernels above)
# --------------------------------------------------------------------------
class NoiseAugPallas:
    def __init__(self, num_frames, rir_len=16, key=None):
        if key is None:
            key = jax.random.PRNGKey(0)
        self.num_frames = num_frames
        self.length = num_frames * 160 + 240
        self.padded_len = _round_up(self.length, _PAD_TO)
        self.rows = self.padded_len // _LANES            # multiple of 16

        self.noisesnr = {'noise': (0.0, 15.0),
                         'speech': (13.0, 20.0),
                         'music': (5.0, 15.0)}
        # deterministic noise counts (within the module's allowed ranges)
        self.numnoise = {'noise': 1, 'speech': 3, 'music': 1}

        k_rir, k_n, k_s, k_m, k_snr = jax.random.split(key, 5)
        self.rir = jax.random.normal(k_rir, (1, rir_len), jnp.float32)
        # RIR folded into the two banded MXU tap matrices ONCE, at init.
        self.rev_t, self.rev_tprev = build_rev_tap_matrices(self.rir)

        # Noise bank stored directly in the padded dense (N, rows, 128) layout
        # and in bf16 (dominant HBM traffic); accumulation stays f32 in-kernel.
        def make_bank(k, n):
            flat = 0.1 * jax.random.normal(k, (n, self.length), jnp.float32)
            flat = jnp.pad(flat, ((0, 0), (0, self.padded_len - self.length)))
            return flat.reshape(n, self.rows, _LANES).astype(jnp.bfloat16)

        self.noisebank = {'noise': make_bank(k_n, self.numnoise['noise']),
                          'speech': make_bank(k_s, self.numnoise['speech']),
                          'music': make_bank(k_m, self.numnoise['music'])}

        self.snrs = {}
        self.snr_pre = {}
        for i, cat in enumerate(['noise', 'speech', 'music']):
            lo, hi = self.noisesnr[cat]
            kk = jax.random.fold_in(k_snr, i)
            snr = jax.random.uniform(kk, (self.numnoise[cat],), jnp.float32,
                                     minval=lo, maxval=hi)
            self.snrs[cat] = snr
            # 10**(-snr/20) precomputed on host -> no in-kernel exp
            self.snr_pre[cat] = (10.0 ** (-snr / 20.0)).astype(jnp.float32)

    # -- dense-layout helpers (one pad / one slice per forward) ---------------
    def _to_dense(self, x):
        # (B, L) -> (B, rows, 128) zero-padded slabs; lane = fast time axis.
        xp = jnp.pad(x, ((0, 0), (0, self.padded_len - self.length)))
        return xp.reshape(x.shape[0], self.rows, _LANES)

    def _from_dense(self, x3d):
        return x3d.reshape(x3d.shape[0], -1)[:, : self.length]

    # -- dense-slab augmentation ops (stay in (B,rows,128) for pipelining) ----
    def add_rev_dense(self, x3d):
        return add_rev_pallas(x3d, self.rev_t, self.rev_tprev)

    def add_noise_dense(self, x3d, cats):
        banks = [self.noisebank[c] for c in cats]
        pres = [self.snr_pre[c] for c in cats]
        return add_noise_pallas(x3d, banks, pres, self.length)

    # -- forward ---------------------------------------------------------------
    def forward(self, x, augtype):
        # x: (B, L) or (L,) f32; augtype is a deterministic int, shared over B
        squeeze = (x.ndim == 1)
        if squeeze:
            x = x[None]
        if augtype == 0:
            y = x
        else:
            x3d = self._to_dense(x)
            if augtype == 1:
                y3d = self.add_rev_dense(x3d)
            elif augtype == 2:
                y3d = self.add_noise_dense(x3d, ['speech'])
            elif augtype == 3:
                y3d = self.add_noise_dense(x3d, ['music'])
            elif augtype == 4:
                y3d = self.add_noise_dense(x3d, ['noise'])
            elif augtype == 5:
                # Fused: both categories mixed inside ONE pallas_call; the
                # music stage re-measures clean_db from the speech-mixed audio,
                # exactly like the original's two sequential add_noise calls.
                y3d = self.add_noise_dense(x3d, ['speech', 'music'])
            else:
                raise ValueError(f"bad augtype {augtype}")
            y = self._from_dense(y3d)
        return y[0] if squeeze else y


# --------------------------------------------------------------------------
# Plain-JAX references (original numpy formulas) for validation
# --------------------------------------------------------------------------
def _ref_conv_trunc(x, taps, L):
    # y[n] = sum_j taps[j] * x[n - j], n < L   (== convolve 'full' truncated)
    R = taps.shape[0]
    xp = jnp.pad(x, (R - 1, 0))
    y = jnp.zeros((L,), jnp.float32)
    for j in range(R):
        y = y + taps[j] * xp[R - 1 - j: R - 1 - j + L]
    return y


def _ref_add_noise(audio, noises, snr):
    clean_db = 10.0 * jnp.log10(jnp.mean(audio ** 2) + 1e-4)
    noise_db = 10.0 * jnp.log10(jnp.mean(noises ** 2, axis=1) + 1e-4)
    scale = jnp.sqrt(10.0 ** ((clean_db - noise_db - snr) / 10.0))
    return audio + jnp.sum(scale[:, None] * noises, axis=0)


if __name__ == "__main__":
    key = jax.random.PRNGKey(0)
    k_params, k_x = jax.random.split(key)

    num_frames = 2               # L = 2*160 + 240 = 560 -> padded 2048 (16 x 128)
    B = 2
    aug = NoiseAugPallas(num_frames, rir_len=16, key=k_params)
    L = aug.length

    x = jax.random.normal(k_x, (B, L), jnp.float32)

    taps_ref = aug.rir[0] / jnp.sqrt(jnp.sum(aug.rir ** 2))

    def bank_f32(cat):
        n = aug.numnoise[cat]
        return aug.noisebank[cat].astype(jnp.float32).reshape(n, -1)[:, :L]

    def ref_forward(xb, t):
        def one(xi):
            if t == 0:
                return xi
            if t == 1:
                return _ref_conv_trunc(xi, taps_ref, L)
            if t == 2:
                return _ref_add_noise(xi, bank_f32('speech'), aug.snrs['speech'])
            if t == 3:
                return _ref_add_noise(xi, bank_f32('music'), aug.snrs['music'])
            if t == 4:
                return _ref_add_noise(xi, bank_f32('noise'), aug.snrs['noise'])
            y = _ref_add_noise(xi, bank_f32('speech'), aug.snrs['speech'])
            return _ref_add_noise(y, bank_f32('music'), aug.snrs['music'])
        return jnp.stack([one(xb[b]) for b in range(xb.shape[0])])

    outs = {t: aug.forward(x, t) for t in range(6)}       # exercise every branch
    outs = jax.block_until_ready(outs)

    for t in range(6):
        y = outs[t]
        assert y.shape == (B, L) and y.dtype == jnp.float32, (t, y.shape, y.dtype)
        assert bool(jnp.all(jnp.isfinite(y))), t
        ref = ref_forward(x, t)
        # Rev case: the f32 MXU matmul may run as a multi-pass bf16 decomposition
        # depending on generation -> slightly looser tolerance (structural errors
        # in the banding would be O(1), so this still validates correctness).
        tol = 1e-2 if t == 1 else 2e-3
        assert bool(jnp.allclose(y, ref, atol=tol, rtol=tol)), t

    print("KERNEL_OK")
</pallas_src>

<mosaic_0001>
module attributes {stable_mosaic.version = 11 : i64} {
  func.func @_rev_conv_kernel(%arg0: i32, %arg1: memref<128x128xf32, #tpu.memory_space<vmem>>, %arg2: memref<128x128xf32, #tpu.memory_space<vmem>>, %arg3: memref<1x16x128xf32, #tpu.memory_space<vmem>>, %arg4: memref<1x16x128xf32, #tpu.memory_space<vmem>>) attributes {dimension_semantics = [#tpu.dimension_semantics<parallel>], iteration_bounds = array<i64: 2>, scalar_prefetch = 0 : i64, scratch_operands = 0 : i64, tpu.core_type = #tpu.core_type<tc>, window_params = [{pipeline_mode = #tpu.pipeline_mode<synchronous>, transform_indices = @transform_0, window_bounds = array<i64: 128, 128>}, {pipeline_mode = #tpu.pipeline_mode<synchronous>, transform_indices = @transform_1, window_bounds = array<i64: 128, 128>}, {transform_indices = @transform_2, window_bounds = array<i64: 1, 16, 128>}, {transform_indices = @transform_3, window_bounds = array<i64: 1, 16, 128>}]} {
    %c0 = arith.constant 0 : index
    %c0_0 = arith.constant 0 : index
    %c0_1 = arith.constant 0 : index
    %0 = vector.load %arg3[%c0, %c0_0, %c0_1] : memref<1x16x128xf32, #tpu.memory_space<vmem>>, vector<1x16x128xf32>
    %1 = vector.shape_cast %0 : vector<1x16x128xf32> to vector<16x128xf32>
    %2 = tpu.iota {dimensions = array<i32: 0>} : vector<16x128xi32>
    %c0_i32 = arith.constant 0 : i32
    %3 = vector.broadcast %c0_i32 : i32 to vector<16x128xi32>
    %4 = arith.cmpi eq, %2, %3 : vector<16x128xi32>
    %c1_i32 = arith.constant 1 : i32
    %5 = tpu.dynamic_rotate %1 by %c1_i32 dim 0 : vector<16x128xf32>, i32 -> vector<16x128xf32>
    %cst = arith.constant 0.000000e+00 : f32
    %6 = vector.broadcast %cst : f32 to vector<16x128xf32>
    %7 = arith.select %4, %6, %5 : vector<16x128xi1>, vector<16x128xf32>
    %c0_2 = arith.constant 0 : index
    %c0_3 = arith.constant 0 : index
    %8 = vector.load %arg1[%c0_2, %c0_3] : memref<128x128xf32, #tpu.memory_space<vmem>>, vector<128x128xf32>
    %cst_4 = arith.constant dense<0.000000e+00> : vector<16x128xf32>
    %9 = tpu.matmul %1, %8, %cst_4 {dimension_numbers = #tpu.dot_dimension_numbers<[1], [0], [0], [1], [0, 0, 1, 1], [], []>} : vector<16x128xf32>, vector<128x128xf32>, vector<16x128xf32> -> vector<16x128xf32>
    %c0_5 = arith.constant 0 : index
    %c0_6 = arith.constant 0 : index
    %10 = vector.load %arg2[%c0_5, %c0_6] : memref<128x128xf32, #tpu.memory_space<vmem>>, vector<128x128xf32>
    %cst_7 = arith.constant dense<0.000000e+00> : vector<16x128xf32>
    %11 = tpu.matmul %7, %10, %cst_7 {dimension_numbers = #tpu.dot_dimension_numbers<[1], [0], [0], [1], [0, 0, 1, 1], [], []>} : vector<16x128xf32>, vector<128x128xf32>, vector<16x128xf32> -> vector<16x128xf32>
    %12 = arith.addf %9, %11 : vector<16x128xf32>
    %c0_8 = arith.constant 0 : index
    %c0_9 = arith.constant 0 : index
    %c0_10 = arith.constant 0 : index
    %13 = vector.load %arg4[%c0_8, %c0_9, %c0_10] : memref<1x16x128xf32, #tpu.memory_space<vmem>>, vector<1x16x128xf32>
    %14 = vector.shape_cast %13 : vector<1x16x128xf32> to vector<16x128xf32>
    %15 = vector.shape_cast %12 : vector<16x128xf32> to vector<1x16x128xf32>
    tpu.vector_store %arg4[%c0_8, %c0_9, %c0_10], %15 {strides = array<i32>} : memref<1x16x128xf32, #tpu.memory_space<vmem>>, vector<1x16x128xf32>,
    return
  }
  func.func @transform_0(%arg0: i32) -> (i32, i32) {
    %c0_i32 = arith.constant 0 : i32
    %c0_i32_0 = arith.constant 0 : i32
    %c0_i32_1 = arith.constant 0 : i32
    return %c0_i32, %c0_i32_0 : i32, i32
  }
  func.func @transform_1(%arg0: i32) -> (i32, i32) {
    %c0_i32 = arith.constant 0 : i32
    %c0_i32_0 = arith.constant 0 : i32
    %c0_i32_1 = arith.constant 0 : i32
    return %c0_i32, %c0_i32_0 : i32, i32
  }
  func.func @transform_2(%arg0: i32) -> (i32, i32, i32) {
    %c0_i32 = arith.constant 0 : i32
    %c0_i32_0 = arith.constant 0 : i32
    %c0_i32_1 = arith.constant 0 : i32
    return %arg0, %c0_i32, %c0_i32_0 : i32, i32, i32
  }
  func.func @transform_3(%arg0: i32) -> (i32, i32, i32) {
    %c0_i32 = arith.constant 0 : i32
    %c0_i32_0 = arith.constant 0 : i32
    %c0_i32_1 = arith.constant 0 : i32
    return %arg0, %c0_i32, %c0_i32_0 : i32, i32, i32
  }
}

</mosaic_0001>

<llo_original>
// kernel: tpu_custom_call.1
$region0: #{tpu_custom_call.1}
  #allocation0 [shape = 'u32[]', space=smem, size = 0x4, offset = 0x4, fixed_abs, tag = 'smem constant byte address 0x4 - core index']
  #allocation1 [shape = 'u32[144,128]{1,0:T(1,128)}', space=vmem, size = 0x12000, scoped, tag = 'internal scratch']
  %s0 = inlined_call_operand.hbm [shape: f32[128,128], index: 0, kind: input, shape index: {}]
  %s1 = inlined_call_operand.hbm [shape: f32[128,128], index: 1, kind: input, shape index: {}]
  %s2 = inlined_call_operand.hbm [shape: f32[2,16,128], index: 2, kind: input, shape index: {}]
  %s3 = inlined_call_operand.hbm [shape: f32[2,16,128], index: 3, kind: output, shape index: {}]
  %s4 = sld [smem:[#allocation0]]
  $region57: #{tpu_custom_call.1} parent=0
    _
  %s6 = ssub.s32 1, %s4
  %s7 = scalar_select 0, %s6, %s4
  $region1: #{tpu_custom_call.1} parent=0
    #allocation2 [shape = 'u8[65536]{0}', space=vmem, size = 0x10000, scoped, tag = 'input window, operand 0, single buffered']
    #allocation3 [shape = 's32[2]{0}', space=sflag, size = 0x8, scoped, tag = 'scoped memory for tpu_custom_call.1']
    #allocation4 [shape = 's32[2]{0}', space=sflag, size = 0x8, scoped, tag = 'scoped memory for tpu_custom_call.1']
    #allocation5 [shape = 'u8[65536]{0}', space=vmem, size = 0x10000, scoped, tag = 'input window, operand 1, single buffered']
    #allocation6 [shape = 's32[1]{0}', space=sflag, size = 0x4, scoped, tag = 'scoped memory for tpu_custom_call.1']
    #allocation7 [shape = 'u8[16384]{0}', space=vmem, size = 0x4000, scoped, tag = 'input window, operand 2']
    #allocation8 [shape = 'u8[16384]{0}', space=vmem, size = 0x4000, scoped, tag = 'output window, operand 0']
    %8 = vsyncpa [#allocation3], 0
    %9 = vsyncpa [#allocation6], 0
    %10 = vsyncpa [#allocation4], 0
    %s11 = scalar_lea.sflag [#allocation4], 1
    %12 = vsyncpa %s11, 0
    loop: start=0, step=1, limit=4
    $region2: #{tpu_custom_call.1} parent=1 // loop_pre_header
      _
    $region3: #{tpu_custom_call.1} parent=1 // loop_header
      %s14 = sphi 0, %s18
      %p15 = scmp.ge.s32.totalorder %s14, 4
      %s22 = sphi 0, %s22
      %s24 = sphi 0, %s22
      %s25 = sphi 0, %s24
      %s39 = sphi 0, %s25
      %s43 = sphi 0, %s43
      %s45 = sphi 0, %s43
      %s46 = sphi 0, %s45
      %s60 = sphi 0, %s46
      %s66 = sphi 0, %s68
      %s69 = sphi 0, %s66
      %s70 = sphi 0, %s69
      %s86 = sphi 0, %s70
      %s92 = sphi 0, %s94
      %s95 = sphi 0, %s92
      %s96 = sphi 0, %s95
      %s112 = sphi 0, %s96
    $region4: #{tpu_custom_call.1} parent=1 // loop_header_branch
      %17 = sbr.rel (%p15) target = $region8
    $region5: #{tpu_custom_call.1} parent=1 // loop_body
      %s19 = ssub.s32 %s14, 1
      %s20 = ssub.s32 %s14, 2
      %s21 = sadd.s32 %s14, 1
      %s23 = sadd.s32 %s22, 1
      %p26 = scmp.eq.s32.totalorder %s14, 1
      %p27 = scmp.ne.s32.totalorder %s22, %s24
      %p28 = scmp.eq.s32.totalorder %s14, 0
      %p29 = por %p27, %p28
      %p30 = scmp.ne.s32.totalorder %s22, %s24
      %p31 = scmp.eq.s32.totalorder %s19, 1
      %p32 = por %p30, %p31
      %p33 = scmp.ne.s32.totalorder %s24, %s25
      %p34 = scmp.eq.s32.totalorder %s19, 0
      %p35 = por %p33, %p34
      %p36 = scmp.ne.s32.totalorder %s24, %s25
      %p37 = scmp.eq.s32.totalorder %s20, 1
      %p38 = por %p36, %p37
      %p40 = scmp.ne.s32.totalorder %s25, %s39
      %p41 = scmp.eq.s32.totalorder %s20, 0
      %p42 = por %p40, %p41
      %s44 = sadd.s32 %s43, 1
      %p47 = scmp.eq.s32.totalorder %s14, 1
      %p48 = scmp.ne.s32.totalorder %s43, %s45
      %p49 = scmp.eq.s32.totalorder %s14, 0
      %p50 = por %p48, %p49
      %p51 = scmp.ne.s32.totalorder %s43, %s45
      %p52 = scmp.eq.s32.totalorder %s19, 1
      %p53 = por %p51, %p52
      %p54 = scmp.ne.s32.totalorder %s45, %s46
      %p55 = scmp.eq.s32.totalorder %s19, 0
      %p56 = por %p54, %p55
      %p57 = scmp.ne.s32.totalorder %s45, %s46
      %p58 = scmp.eq.s32.totalorder %s20, 1
      %p59 = por %p57, %p58
      %p61 = scmp.ne.s32.totalorder %s46, %s60
      %p62 = scmp.eq.s32.totalorder %s20, 0
      %p63 = por %p61, %p62
      %s64 = ssub.s32 %s14, %s21
      %p65 = scmp.eq.s32.totalorder %s64, 0
      %s67 = sadd.s32 %s66, 1
      %s68 = scalar_select %p65, %s66, %s67
      %p71 = pneg %p65
      %p72 = scmp.eq.s32.totalorder %s14, 1
      %p73 = por %p71, %p72
      %p74 = scmp.ne.s32.totalorder %s66, %s69
      %p75 = scmp.eq.s32.totalorder %s14, 0
      %p76 = por %p74, %p75
      %p77 = scmp.ne.s32.totalorder %s66, %s69
      %p78 = scmp.eq.s32.totalorder %s19, 1
      %p79 = por %p77, %p78
      %p80 = scmp.ne.s32.totalorder %s69, %s70
      %p81 = scmp.eq.s32.totalorder %s19, 0
      %p82 = por %p80, %p81
      %p83 = scmp.ne.s32.totalorder %s69, %s70
      %p84 = scmp.eq.s32.totalorder %s20, 1
      %p85 = por %p83, %p84
      %p87 = scmp.ne.s32.totalorder %s70, %s86
      %p88 = scmp.eq.s32.totalorder %s20, 0
      %p89 = por %p87, %p88
      %s90 = ssub.s32 %s14, %s21
      %p91 = scmp.eq.s32.totalorder %s90, 0
      %s93 = sadd.s32 %s92, 1
      %s94 = scalar_select %p91, %s92, %s93
      %p97 = pneg %p91
      %p98 = scmp.eq.s32.totalorder %s14, 1
      %p99 = por %p97, %p98
      %p100 = scmp.ne.s32.totalorder %s92, %s95
      %p101 = scmp.eq.s32.totalorder %s14, 0
      %p102 = por %p100, %p101
      %p103 = scmp.ne.s32.totalorder %s92, %s95
      %p104 = scmp.eq.s32.totalorder %s19, 1
      %p105 = por %p103, %p104
      %p106 = scmp.ne.s32.totalorder %s95, %s96
      %p107 = scmp.eq.s32.totalorder %s19, 0
      %p108 = por %p106, %p107
      %p109 = scmp.ne.s32.totalorder %s95, %s96
      %p110 = scmp.eq.s32.totalorder %s20, 1
      %p111 = por %p109, %p110
      %p113 = scmp.ne.s32.totalorder %s96, %s112
      %p114 = scmp.eq.s32.totalorder %s20, 0
      %p115 = por %p113, %p114
      %p116 = scmp.le.s32.totalorder 1, %s14
      %p117 = scmp.lt.s32.totalorder %s14, 3
      %p118 = pnand %p116, %p117
      %p119 = pneg %p118
      // Predicated region
      $region9: #{tpu_custom_call.1} parent=5 // pred_check
        _
      $region10: #{tpu_custom_call.1} parent=5 // pred_check_branch
        %121 = sbr.rel (%p118) target = $region12
      $region11: #{tpu_custom_call.1} parent=5 // pred_region
        %s122 = ssub.s32 %s14, 1
        // Predicated region
        $region13: #{tpu_custom_call.1} parent=11 // pred_check
          %p123 = pneg %p35
        $region14: #{tpu_custom_call.1} parent=11 // pred_check_branch
          %125 = sbr.rel (%p123) target = $region16
        $region15: #{tpu_custom_call.1} parent=11 // pred_region
          %s127 = ssub.s32 2048, 2048
          %128 = vsyncadd [#allocation3], %s127
          %s129 = sshll.u32 [#allocation2], 4
          %s130 = int_to_ptr.vmem [resolvable:$true] %s129
          %135 = dma.hbm_to_vmem [thread:$0]  %s0, 2048, %s130, [#allocation3], 128, 128, 8
        $region16: #{tpu_custom_call.1} parent=11 // pred_fallthru
          _
        // Predicated region
        $region17: #{tpu_custom_call.1} parent=11 // pred_check
          %p136 = pneg %p56
        $region18: #{tpu_custom_call.1} parent=11 // pred_check_branch
          %138 = sbr.rel (%p136) target = $region20
        $region19: #{tpu_custom_call.1} parent=11 // pred_region
          %s140 = ssub.s32 2048, 2048
          %141 = vsyncadd [#allocation6], %s140
          %s142 = sshll.u32 [#allocation5], 4
          %s143 = int_to_ptr.vmem [resolvable:$true] %s142
          %148 = dma.hbm_to_vmem [thread:$0]  %s1, 2048, %s143, [#allocation6], 128, 128, 8
        $region20: #{tpu_custom_call.1} parent=11 // pred_fallthru
          _
      $region12: #{tpu_custom_call.1} parent=5 // pred_fallthru
        _
      %p149 = scmp.lt.s32.totalorder %s14, 2
      // Predicated region
      $region21: #{tpu_custom_call.1} parent=5 // pred_check
        %p150 = pneg %p149
      $region22: #{tpu_custom_call.1} parent=5 // pred_check_branch
        %152 = sbr.rel (%p150) target = $region24
      $region23: #{tpu_custom_call.1} parent=5 // pred_region
        // Predicated region
        $region25: #{tpu_custom_call.1} parent=23 // pred_check
          %p153 = pneg %p76
        $region26: #{tpu_custom_call.1} parent=23 // pred_check_branch
          %155 = sbr.rel (%p153) target = $region28
        $region27: #{tpu_custom_call.1} parent=23 // pred_region
          %s156 = sand.u32 %s14, 1
          %s157 = scalar_lea.sflag [#allocation3], %s156
          %s158 = sand.u32 %s66, 1
          %s159 = smul.addr %s158, 16
          %s160 = scalar_lea.vmem [#allocation7], %s159
          %s162 = ssub.s32 256, 256
          %163 = vsyncadd %s157, %s162
          %s164 = smul.addr %s14, 2
          %s165 = smul.addr %s164, 128
          %s166 = scalar_lea.hbm %s2, %s165
          %s167 = sshll.u32 %s160, 4
          %s168 = int_to_ptr.vmem [resolvable:$true] %s167
          %173 = dma.hbm_to_vmem [thread:$0]  %s166, 256, %s168, %s157, 128, 128, 8
        $region28: #{tpu_custom_call.1} parent=23 // pred_fallthru
          _
      $region24: #{tpu_custom_call.1} parent=5 // pred_fallthru
        _
      %p174 = scmp.le.s32.totalorder 1, %s14
      %p175 = scmp.lt.s32.totalorder %s14, 3
      %p176 = pnand %p174, %p175
      %p177 = pneg %p176
      // Predicated region
      $region29: #{tpu_custom_call.1} parent=5 // pred_check
        _
      $region30: #{tpu_custom_call.1} parent=5 // pred_check_branch
        %179 = sbr.rel (%p176) target = $region32
      $region31: #{tpu_custom_call.1} parent=5 // pred_region
        %s180 = ssub.s32 %s14, 1
        // Predicated region
        $region33: #{tpu_custom_call.1} parent=31 // pred_check
          %p181 = pneg %p35
        $region34: #{tpu_custom_call.1} parent=31 // pred_check_branch
          %183 = sbr.rel (%p181) target = $region36
        $region35: #{tpu_custom_call.1} parent=31 // pred_region
          %184 = dma.done [#allocation3], 2048
        $region36: #{tpu_custom_call.1} parent=31 // pred_fallthru
          _
        // Predicated region
        $region37: #{tpu_custom_call.1} parent=31 // pred_check
          %p185 = pneg %p56
        $region38: #{tpu_custom_call.1} parent=31 // pred_check_branch
          %187 = sbr.rel (%p185) target = $region40
        $region39: #{tpu_custom_call.1} parent=31 // pred_region
          %188 = dma.done [#allocation6], 2048
        $region40: #{tpu_custom_call.1} parent=31 // pred_fallthru
          _
        %s189 = sand.u32 %s19, 1
        %s190 = scalar_lea.sflag [#allocation3], %s189
        %s191 = sand.u32 %s69, 1
        %s192 = smul.addr %s191, 16
        %s193 = scalar_lea.vmem [#allocation7], %s192
        // Predicated region
        $region41: #{tpu_custom_call.1} parent=31 // pred_check
          %p194 = pneg %p82
        $region42: #{tpu_custom_call.1} parent=31 // pred_check_branch
          %196 = sbr.rel (%p194) target = $region44
        $region43: #{tpu_custom_call.1} parent=31 // pred_region
          %197 = dma.done %s190, 256
        $region44: #{tpu_custom_call.1} parent=31 // pred_fallthru
          _
        %p198 = pneg %p35
        %p199 = pneg %p32
        %p200 = pneg %p56
        %p201 = pneg %p53
        %s202 = sand.u32 %s19, 1
        %s203 = scalar_lea.sflag [#allocation3], %s202
        %s204 = sand.u32 %s69, 1
        %s205 = smul.addr %s204, 16
        %s206 = scalar_lea.vmem [#allocation7], %s205
        %p207 = pneg %p82
        %p208 = pneg %p79
        %p209 = pneg %p108
        %p210 = pneg %p105
        %s211 = sand.u32 %s95, 1
        %s212 = scalar_lea.sflag [#allocation4], %s211
        %s213 = sand.u32 %s95, 1
        %s214 = smul.addr %s213, 16
        %s215 = scalar_lea.vmem [#allocation8], %s214
        %v216 = vld [vmem:[%s193] sm:$0xff]
        %v217 = vld [vmem:[%s193 + $0x8] sm:$0xff]
        %v218 = vlaneseq
        %v219 = vshrl.u32 %v218, 7
        %v220 = vadd.s32 %v219, 8
        %vm221 = vcmp.eq.s32.totalorder %v219, 0
        %vm222 = vcmp.eq.s32.totalorder %v220, 0
        %v223 = vrot.slane %v216, 7
        %v224 = vrot.slane %v217, 7
        %vm225 = vcmp.lt.s32.totalorder %v219, 1
        %v226 = vsel %vm225, %v223, %v224
        %v227 = vsel %vm225, %v224, %v223
        %v228 = vsel %vm221, 0.0, %v227
        %v229 = vsel %vm222, 0.0, %v226
        %v230 = vld [vmem:[#allocation2] sm:$0xff]
        %v231 = vld [vmem:[#allocation2 + $0x8] sm:$0xff]
        %v232 = vld [vmem:[#allocation2 + $0x10] sm:$0xff]
        %v233 = vld [vmem:[#allocation2 + $0x18] sm:$0xff]
        %v234 = vld [vmem:[#allocation2 + $0x20] sm:$0xff]
        %v235 = vld [vmem:[#allocation2 + $0x28] sm:$0xff]
        %v236 = vld [vmem:[#allocation2 + $0x30] sm:$0xff]
        %v237 = vld [vmem:[#allocation2 + $0x38] sm:$0xff]
        %v238 = vld [vmem:[#allocation2 + $0x40] sm:$0xff]
        %v239 = vld [vmem:[#allocation2 + $0x48] sm:$0xff]
        %v240 = vld [vmem:[#allocation2 + $0x50] sm:$0xff]
        %v241 = vld [vmem:[#allocation2 + $0x58] sm:$0xff]
        %v242 = vld [vmem:[#allocation2 + $0x60] sm:$0xff]
        %v243 = vld [vmem:[#allocation2 + $0x68] sm:$0xff]
        %v244 = vld [vmem:[#allocation2 + $0x70] sm:$0xff]
        %v245 = vld [vmem:[#allocation2 + $0x78] sm:$0xff]
        %v246 = vld [vmem:[#allocation5] sm:$0xff]
        %v247 = vld [vmem:[#allocation5 + $0x8] sm:$0xff]
        %v248 = vld [vmem:[#allocation5 + $0x10] sm:$0xff]
        %v249 = vld [vmem:[#allocation5 + $0x18] sm:$0xff]
        %v250 = vld [vmem:[#allocation5 + $0x20] sm:$0xff]
        %v251 = vld [vmem:[#allocation5 + $0x28] sm:$0xff]
        %v252 = vld [vmem:[#allocation5 + $0x30] sm:$0xff]
        %v253 = vld [vmem:[#allocation5 + $0x38] sm:$0xff]
        %v254 = vld [vmem:[#allocation5 + $0x40] sm:$0xff]
        %v255 = vld [vmem:[#allocation5 + $0x48] sm:$0xff]
        %v256 = vld [vmem:[#allocation5 + $0x50] sm:$0xff]
        %v257 = vld [vmem:[#allocation5 + $0x58] sm:$0xff]
        %v258 = vld [vmem:[#allocation5 + $0x60] sm:$0xff]
        %v259 = vld [vmem:[#allocation5 + $0x68] sm:$0xff]
        %v260 = vld [vmem:[#allocation5 + $0x70] sm:$0xff]
        %v261 = vld [vmem:[#allocation5 + $0x78] sm:$0xff]
        %262 = vmatprep.subr.mxu0 0.0
        %263 = vmatpush1.msra.mxu0 %v246
        %264 = vmatprep.subr.mxu0 0.0
        %265 = vmatpush1.msra.mxu0 %v247
        %266 = vmatprep.subr.mxu0 0.0
        %267 = vmatpush1.msra.mxu0 %v248
        %268 = vmatprep.subr.mxu0 0.0
        %269 = vmatpush1.msra.mxu0 %v249
        %270 = vmatprep.subr.mxu0 0.0
        %271 = vmatpush1.msra.mxu0 %v250
        %272 = vmatprep.subr.mxu0 0.0
        %273 = vmatpush1.msra.mxu0 %v251
        %274 = vmatprep.subr.mxu0 0.0
        %275 = vmatpush1.msra.mxu0 %v252
        %276 = vmatprep.subr.mxu0 0.0
        %277 = vmatpush1.msra.mxu0 %v253
        %278 = vmatprep.subr.mxu0 0.0
        %279 = vmatpush1.msra.mxu0 %v254
        %280 = vmatprep.subr.mxu0 0.0
        %281 = vmatpush1.msra.mxu0 %v255
        %282 = vmatprep.subr.mxu0 0.0
        %283 = vmatpush1.msra.mxu0 %v256
        %284 = vmatprep.subr.mxu0 0.0
        %285 = vmatpush1.msra.mxu0 %v257
        %286 = vmatprep.subr.mxu0 0.0
        %287 = vmatpush1.msra.mxu0 %v258
        %288 = vmatprep.subr.mxu0 0.0
        %289 = vmatpush1.msra.mxu0 %v259
        %290 = vmatprep.subr.mxu0 0.0
        %291 = vmatpush1.msra.mxu0 %v260
        %292 = vmatprep.subr.mxu0 0.0
        %293 = vmatpush1.msra.mxu0 %v261
        %294 = vmatprep.subr.mxu0 0.0
        %295 = vmatpush1.msra.mxu0 0.0
        %296 = vmatprep.subr.mxu0 0.0
        %297 = vmatpush1.msra.mxu0 0.0
        %298 = vmatprep.subr.mxu0 0.0
        %299 = vmatpush1.msra.mxu0 0.0
        %300 = vmatprep.subr.mxu0 0.0
        %301 = vmatpush1.msra.mxu0 0.0
        %302 = vmatprep.subr.mxu0 0.0
        %303 = vmatpush1.msra.mxu0 0.0
        %304 = vmatprep.subr.mxu0 0.0
        %305 = vmatpush1.msra.mxu0 0.0
        %306 = vmatprep.subr.mxu0 0.0
        %307 = vmatpush1.msra.mxu0 0.0
        %308 = vmatprep.subr.mxu0 0.0
        %309 = vmatpush1.msra.mxu0 0.0
        %310 = vmatprep.subr.mxu0 0.0
        %311 = vmatpush1.msra.mxu0 0.0
        %312 = vmatprep.subr.mxu0 0.0
        %313 = vmatpush1.msra.mxu0 0.0
        %314 = vmatprep.subr.mxu0 0.0
        %315 = vmatpush1.msra.mxu0 0.0
        %316 = vmatprep.subr.mxu0 0.0
        %317 = vmatpush1.msra.mxu0 0.0
        %318 = vmatprep.subr.mxu0 0.0
        %319 = vmatpush1.msra.mxu0 0.0
        %320 = vmatprep.subr.mxu0 0.0
        %321 = vmatpush1.msra.mxu0 0.0
        %322 = vmatprep.subr.mxu0 0.0
        %323 = vmatpush1.msra.mxu0 0.0
        %324 = vmatprep.subr.mxu0 0.0
        %325 = vmatpush1.msra.mxu0 0.0
        %326 = vmatprep.mubr.f32.mxu0 0.0
        %327 = vmatmul.mubr.f32.gmra.mrb[0].mxu0 %v228
        %v328 = vpop.f32.mrb[0].mxu0
        %v329 = vadd.f32 0.0, %v328
        %v330 = vpop.f32.mrb[0].mxu0
        %331 = vmatprep.mubr.f32.mxu0 0.0
        %332 = vmatmul.mubr.f32.gmra.mrb[0].mxu0 %v229
        %v333 = vpop.f32.mrb[0].mxu0
        %v334 = vadd.f32 0.0, %v333
        %v335 = vpop.f32.mrb[0].mxu0
        %336 = vdwg.mxu0
        %337 = vmatprep.subr.mxu0 0.0
        %338 = vmatpush1.msra.mxu0 %v230
        %339 = vmatprep.subr.mxu0 0.0
        %340 = vmatpush1.msra.mxu0 %v231
        %341 = vmatprep.subr.mxu0 0.0
        %342 = vmatpush1.msra.mxu0 %v232
        %343 = vmatprep.subr.mxu0 0.0
        %344 = vmatpush1.msra.mxu0 %v233
        %345 = vmatprep.subr.mxu0 0.0
        %346 = vmatpush1.msra.mxu0 %v234
        %347 = vmatprep.subr.mxu0 0.0
        %348 = vmatpush1.msra.mxu0 %v235
        %349 = vmatprep.subr.mxu0 0.0
        %350 = vmatpush1.msra.mxu0 %v236
        %351 = vmatprep.subr.mxu0 0.0
        %352 = vmatpush1.msra.mxu0 %v237
        %353 = vmatprep.subr.mxu0 0.0
        %354 = vmatpush1.msra.mxu0 %v238
        %355 = vmatprep.subr.mxu0 0.0
        %356 = vmatpush1.msra.mxu0 %v239
        %357 = vmatprep.subr.mxu0 0.0
        %358 = vmatpush1.msra.mxu0 %v240
        %359 = vmatprep.subr.mxu0 0.0
        %360 = vmatpush1.msra.mxu0 %v241
        %361 = vmatprep.subr.mxu0 0.0
        %362 = vmatpush1.msra.mxu0 %v242
        %363 = vmatprep.subr.mxu0 0.0
        %364 = vmatpush1.msra.mxu0 %v243
        %365 = vmatprep.subr.mxu0 0.0
        %366 = vmatpush1.msra.mxu0 %v244
        %367 = vmatprep.subr.mxu0 0.0
        %368 = vmatpush1.msra.mxu0 %v245
        %369 = vmatprep.subr.mxu0 0.0
        %370 = vmatpush1.msra.mxu0 0.0
        %371 = vmatprep.subr.mxu0 0.0
        %372 = vmatpush1.msra.mxu0 0.0
        %373 = vmatprep.subr.mxu0 0.0
        %374 = vmatpush1.msra.mxu0 0.0
        %375 = vmatprep.subr.mxu0 0.0
        %376 = vmatpush1.msra.mxu0 0.0
        %377 = vmatprep.subr.mxu0 0.0
        %378 = vmatpush1.msra.mxu0 0.0
        %379 = vmatprep.subr.mxu0 0.0
        %380 = vmatpush1.msra.mxu0 0.0
        %381 = vmatprep.subr.mxu0 0.0
        %382 = vmatpush1.msra.mxu0 0.0
        %383 = vmatprep.subr.mxu0 0.0
        %384 = vmatpush1.msra.mxu0 0.0
        %385 = vmatprep.subr.mxu0 0.0
        %386 = vmatpush1.msra.mxu0 0.0
        %387 = vmatprep.subr.mxu0 0.0
        %388 = vmatpush1.msra.mxu0 0.0
        %389 = vmatprep.subr.mxu0 0.0
        %390 = vmatpush1.msra.mxu0 0.0
        %391 = vmatprep.subr.mxu0 0.0
        %392 = vmatpush1.msra.mxu0 0.0
        %393 = vmatprep.subr.mxu0 0.0
        %394 = vmatpush1.msra.mxu0 0.0
        %395 = vmatprep.subr.mxu0 0.0
        %396 = vmatpush1.msra.mxu0 0.0
        %397 = vmatprep.subr.mxu0 0.0
        %398 = vmatpush1.msra.mxu0 0.0
        %399 = vmatprep.subr.mxu0 0.0
        %400 = vmatpush1.msra.mxu0 0.0
        %401 = vmatprep.mubr.f32.mxu0 0.0
        %402 = vmatmul.mubr.f32.gmra.mrb[0].mxu0 %v216
        %v403 = vpop.f32.mrb[0].mxu0
        %v404 = vadd.f32 %v329, %v403
        %v405 = vpop.f32.mrb[0].mxu0
        %406 = vmatprep.mubr.f32.mxu0 0.0
        %407 = vmatmul.mubr.f32.gmra.mrb[0].mxu0 %v217
        %v408 = vpop.f32.mrb[0].mxu0
        %v409 = vadd.f32 %v334, %v408
        %v410 = vpop.f32.mrb[0].mxu0
        %411 = vdwg.mxu0
        %412 = vst [vmem:[%s215] sm:$0xff] %v404
        %413 = vst [vmem:[%s215 + $0x8] sm:$0xff] %v409
        %s414 = sand.u32 %s95, 1
        %s415 = scalar_lea.sflag [#allocation4], %s414
        %s416 = sand.u32 %s95, 1
        %s417 = smul.addr %s416, 16
        %s418 = scalar_lea.vmem [#allocation8], %s417
        // Predicated region
        $region45: #{tpu_custom_call.1} parent=31 // pred_check
          %p419 = pneg %p105
        $region46: #{tpu_custom_call.1} parent=31 // pred_check_branch
          %421 = sbr.rel (%p419) target = $region48
        $region47: #{tpu_custom_call.1} parent=31 // pred_region
          %s423 = ssub.s32 256, 256
          %424 = vsyncadd %s415, %s423
          %s425 = smul.addr %s19, 2
          %s426 = smul.addr %s425, 128
          %s427 = scalar_lea.hbm %s3, %s426
          %s428 = sshll.u32 %s418, 4
          %s429 = int_to_ptr.vmem [resolvable:$true] %s428
          %434 = dma.vmem_to_hbm [thread:$0]  %s429, 256, %s427, %s415, 128, 128, 8
        $region48: #{tpu_custom_call.1} parent=31 // pred_fallthru
          _
      $region32: #{tpu_custom_call.1} parent=5 // pred_fallthru
        _
      %p435 = scmp.le.s32.totalorder 2, %s14
      // Predicated region
      $region49: #{tpu_custom_call.1} parent=5 // pred_check
        %p436 = pneg %p435
      $region50: #{tpu_custom_call.1} parent=5 // pred_check_branch
        %438 = sbr.rel (%p436) target = $region52
      $region51: #{tpu_custom_call.1} parent=5 // pred_region
        %s439 = ssub.s32 %s14, 2
        // Predicated region
        $region53: #{tpu_custom_call.1} parent=51 // pred_check
          %p440 = pneg %p111
        $region54: #{tpu_custom_call.1} parent=51 // pred_check_branch
          %442 = sbr.rel (%p440) target = $region56
        $region55: #{tpu_custom_call.1} parent=51 // pred_region
          %s443 = sand.u32 %s96, 1
          %s444 = scalar_lea.sflag [#allocation4], %s443
          %s445 = sand.u32 %s96, 1
          %s446 = smul.addr %s445, 16
          %s447 = scalar_lea.vmem [#allocation8], %s446
          %448 = dma.done %s444, 256
        $region56: #{tpu_custom_call.1} parent=51 // pred_fallthru
          _
      $region52: #{tpu_custom_call.1} parent=5 // pred_fallthru
        _
    $region6: #{tpu_custom_call.1} parent=1 // loop_footer
      %s18 = sadd.s32 1, %s14
    $region7: #{tpu_custom_call.1} parent=1 // loop_footer_branch
      %13 = sbr.rel target = $region3
    $region8: #{tpu_custom_call.1} parent=1 // loop_exit
      _
    %449 = vsyncpa [#allocation3], 1
    %s450 = scalar_lea.sflag [#allocation3], 1
    %451 = vsyncpa %s450, 1
    %452 = vsyncpa [#allocation6], 1
    %453 = vsyncpa [#allocation4], 1
    %s454 = scalar_lea.sflag [#allocation4], 1
    %455 = vsyncpa %s454, 1

</llo_original>
